<compile_context>
chip_gen: v6e
topology: v6e:2x2x1
jax: 0.10.0
libtpu: 0.0.40
codegen_flags: <defaults>
</compile_context>

<pallas_src>
import jax
import jax.numpy as jnp
from jax.experimental import pallas as pl
from jax.experimental.pallas import tpu as pltpu


def _fill_kernel(c_ref, o_ref):
    # c_ref : SMEM, shape (1,), float32 -- the constant prior mean
    # o_ref : VMEM, (block_rows, C) lane/sublane-dense output block
    o_ref[...] = jnp.full(o_ref.shape, c_ref[0], o_ref.dtype)


def _default_block_bytes():
    """Generation-aware output block size for the writeback pipeline."""
    try:
        kind = jax.devices()[0].device_kind.lower()
    except Exception:
        kind = ""
    if "v7" in kind:
        # 64 MiB physical VMEM per TensorCore: keep the double-buffered
        # output at 2 x 16 MiB (+ headroom) so the pipeline stays resident.
        return 16 << 20
    if "v5" in kind or "v6" in kind:
        # 128 MiB physical VMEM: 32 MiB blocks amortize the ~0.35 us/step
        # grid overhead against >= 20 us of writeback DMA per step.
        return 32 << 20
    return 16 << 20


def constant_mean_forward(c, x, *, lane_width=1024, block_bytes=None):
    """Pallas implementation of ConstantMean.forward for 2D input (N, D).

    Returns an (N,)-shaped array filled with c, in the promoted dtype of
    (c, x) -- matching `c * torch.ones_like(input[:, 0])`.  Only x's static
    shape/dtype are used; no input data is streamed through the kernel.
    """
    N = int(x.shape[0])
    out_dtype = jnp.promote_types(jnp.result_type(c), x.dtype)
    if N == 0:
        return jnp.zeros((0,), out_dtype)

    # Keep the SMEM scalar 32-bit regardless of the output dtype; the kernel
    # casts on the broadcast store (exact for the relevant float cases).
    c_arr = jnp.asarray(c, dtype=jnp.float32).reshape(1)

    itemsize = jnp.dtype(out_dtype).itemsize
    if block_bytes is None:
        block_bytes = _default_block_bytes()

    # Lane width: a large multiple of 128 (lane-dense, unmasked vst), shrunk
    # for small N so the padded slab does not balloon.
    C = max(128, (int(lane_width) // 128) * 128)
    while C > 128 and C // 2 >= N:
        C //= 2

    rows = pl.cdiv(N, C)  # rows needed to cover N in the (rows, C) slab

    if rows < 8:
        # Full-extent second-to-last dim (legal per the (8,128) tiling rule).
        block_rows = rows
    else:
        # Multiple of 8 (sublane), sized so one block ~= block_bytes, and no
        # larger than the slab itself.
        block_rows = max(8, (block_bytes // (C * itemsize)) // 8 * 8)
        block_rows = min(block_rows, (rows // 8) * 8)

    num_blocks = pl.cdiv(rows, block_rows)
    blk_bytes = block_rows * C * itemsize
    # Double-buffered output writeback + headroom; floored at the most
    # conservative default scoped limit (16 MiB on v5e) so tiny outputs do
    # not under-provision the pipeline.
    vmem_limit = max(2 * blk_bytes + (4 << 20), 16 << 20)

    out2d = pl.pallas_call(
        _fill_kernel,
        out_shape=jax.ShapeDtypeStruct((rows, C), out_dtype),
        grid=(num_blocks,),
        in_specs=[pl.BlockSpec(memory_space=pltpu.MemorySpace.SMEM)],
        out_specs=pl.BlockSpec((block_rows, C), lambda i: (i, 0)),
        compiler_params=pltpu.CompilerParams(
            dimension_semantics=("parallel",),
            vmem_limit_bytes=vmem_limit,
        ),
    )(c_arr)

    # Slab -> (N,): reshape of a contiguous row-major array; slice only when
    # the slab is padded (N not a multiple of the lane width).
    flat = out2d.reshape(rows * C)
    return flat if rows * C == N else flat[:N]


if __name__ == "__main__":
    # Deterministic parameter init (module __init__: c = prior_mean_init;
    # use a nonzero value so the fill is visible).
    prior_mean_init = 0.5
    c = jnp.float32(prior_mean_init)

    # Small input consistent with a GP mean function: (N, D) design matrix.
    key = jax.random.PRNGKey(0)
    x = jax.random.normal(key, (8, 32), dtype=jnp.float32)

    out = jax.block_until_ready(constant_mean_forward(c, x))
    ref = c * jnp.ones_like(x[:, 0])
    assert out.shape == (8,)
    assert out.dtype == ref.dtype
    assert bool(jnp.allclose(out, ref)), "mismatch vs. reference (small)"

    # Exercise the multi-step tiled path (several grid steps + a partial
    # final block) by shrinking block_bytes; still a small array.
    x2 = jnp.ones((20000, 2), dtype=jnp.float32)
    out2 = jax.block_until_ready(
        constant_mean_forward(c, x2, block_bytes=32 << 10))
    ref2 = c * jnp.ones_like(x2[:, 0])
    assert out2.shape == (20000,)
    assert bool(jnp.allclose(out2, ref2)), "mismatch vs. reference (tiled)"

    # Dtype-promotion check (bf16 input, float32 parameter -> float32 out).
    x3 = jax.random.normal(jax.random.PRNGKey(1), (512, 16), dtype=jnp.bfloat16)
    out3 = jax.block_until_ready(constant_mean_forward(c, x3))
    ref3 = c * jnp.ones_like(x3[:, 0])
    assert out3.shape == (512,)
    assert out3.dtype == ref3.dtype
    assert bool(jnp.allclose(out3.astype(jnp.float32),
                             ref3.astype(jnp.float32))), "mismatch (bf16)"

    # TODO(synk): ConstantMean with a non-scalar batch_shape parameter (not in
    # the reference module) is not handled.
    print("KERNEL_OK")
</pallas_src>

<mosaic_0001>
module attributes {stable_mosaic.version = 11 : i64} {
  func.func @_fill_kernel(%arg0: i32, %arg1: memref<1xf32, #tpu.memory_space<smem>>, %arg2: memref<1x128xf32, #tpu.memory_space<vmem>>) attributes {dimension_semantics = [#tpu.dimension_semantics<parallel>], iteration_bounds = array<i64: 1>, scalar_prefetch = 0 : i64, scratch_operands = 0 : i64, tpu.core_type = #tpu.core_type<tc>, window_params = [{transform_indices = @transform_0, window_bounds = array<i64: 1>}, {transform_indices = @transform_1, window_bounds = array<i64: 1, 128>}]} {
    %c0 = arith.constant 0 : index
    %0 = memref.load %arg1[%c0] : memref<1xf32, #tpu.memory_space<smem>>
    %1 = vector.broadcast %0 : f32 to vector<1x128xf32>
    %c0_0 = arith.constant 0 : index
    %c0_1 = arith.constant 0 : index
    %2 = vector.load %arg2[%c0_0, %c0_1] : memref<1x128xf32, #tpu.memory_space<vmem>>, vector<1x128xf32>
    tpu.vector_store %arg2[%c0_0, %c0_1], %1 {strides = array<i32>} : memref<1x128xf32, #tpu.memory_space<vmem>>, vector<1x128xf32>,
    return
  }
  func.func @transform_0(%arg0: i32) -> i32 {
    %c0_i32 = arith.constant 0 : i32
    %c0_i32_0 = arith.constant 0 : i32
    return %c0_i32 : i32
  }
  func.func @transform_1(%arg0: i32) -> (i32, i32) {
    %c0_i32 = arith.constant 0 : i32
    %c0_i32_0 = arith.constant 0 : i32
    return %arg0, %c0_i32 : i32, i32
  }
}

</mosaic_0001>

<llo_original>
// kernel: tpu_custom_call.1
$region0: #{tpu_custom_call.1}
  #allocation0 [shape = 'u32[]', space=smem, size = 0x4, offset = 0x4, fixed_abs, tag = 'smem constant byte address 0x4 - core index']
  #allocation1 [shape = 'u32[144,128]{1,0:T(1,128)}', space=vmem, size = 0x12000, scoped, tag = 'internal scratch']
  #allocation2 [shape = 'f32[1]{0:T(128)S(6)}', space=smem, size = 0x200, scoped, tag = 'scoped memory for tpu_custom_call.1']
  %s0 = inlined_call_operand.<no memory space> [shape: f32[1], index: 0, kind: input, shape index: {}]
  %s1 = inlined_call_operand.hbm [shape: f32[1,128], index: 1, kind: output, shape index: {}]
  %s2 = sld [smem:[#allocation0]]
  $region14: #{tpu_custom_call.1} parent=0
    _
  %s4 = ssub.s32 1, %s2
  %s5 = scalar_select 0, %s4, %s2
  %6 = sst [smem:[#allocation2]] %s0
  $region1: #{tpu_custom_call.1} parent=0
    #allocation3 [shape = 'u8[512]{0}', space=vmem, size = 0x400, scoped, tag = 'output window, operand 0, single buffered']
    #allocation4 [shape = 's32[1]{0}', space=sflag, size = 0x4, scoped, tag = 'scoped memory for tpu_custom_call.1']
    %7 = vsyncpa [#allocation4], 0
    // Predicated region
    $region2: #{tpu_custom_call.1} parent=1 // pred_check
      _
    $region3: #{tpu_custom_call.1} parent=1 // pred_check_branch
      %9 = sbr.rel (0) target = $region5
    $region4: #{tpu_custom_call.1} parent=1 // pred_region
      _
    $region5: #{tpu_custom_call.1} parent=1 // pred_fallthru
      _
    %s10 = sld [smem:[#allocation2]]
    %v11 = vstv %s10
    %12 = vst [vmem:[#allocation3] sm:$0x1] %v11
    // Predicated region
    $region6: #{tpu_custom_call.1} parent=1 // pred_check
      _
    $region7: #{tpu_custom_call.1} parent=1 // pred_check_branch
      %14 = sbr.rel (0) target = $region9
    $region8: #{tpu_custom_call.1} parent=1 // pred_region
      %s16 = ssub.s32 16, 16
      %17 = vsyncadd [#allocation4], %s16
      %s19 = sshll.u32 [#allocation3], 4
      %s20 = int_to_ptr.vmem [resolvable:$true] %s19
      %22 = dma.vmem_to_hbm [thread:$0]  %s20, 16, %s1, [#allocation4]
    $region9: #{tpu_custom_call.1} parent=1 // pred_fallthru
      _
    // Predicated region
    $region10: #{tpu_custom_call.1} parent=1 // pred_check
      _
    $region11: #{tpu_custom_call.1} parent=1 // pred_check_branch
      %24 = sbr.rel (0) target = $region13
    $region12: #{tpu_custom_call.1} parent=1 // pred_region
      %25 = dma.done [#allocation4], 16
    $region13: #{tpu_custom_call.1} parent=1 // pred_fallthru
      _
    %26 = vsyncpa [#allocation4], 1

</llo_original>
